<compile_context>
chip_gen: v5e
topology: v5e:2x2
jax: 0.10.0
libtpu: 0.0.40
codegen_flags: <defaults>
</compile_context>

<pallas_src>
import functools

import jax
import jax.numpy as jnp
import numpy as np
from jax import lax
from jax.experimental import pallas as pl
from jax.experimental.pallas import tpu as pltpu

LANE = 128
SUBLANE = 8
_TM_MAX = 8192      # rows per tile -> (8192, 128) f32 = 4 MiB per input per step
_NUM_CORES = 2      # leading "parallel" grid axis (v7x megacore); harmless elsewhere


def _ssd_partial_kernel(
    yt_ref, yp_ref,            # (TM, 128) input tiles
    part_ref,                  # (8, 128) per-core partial-SSD output (resident over j)
    *, tm, chunk, num_blocks, steps_per_core, m_rows, need_row_mask, has_dummy,
):
    c = pl.program_id(0)                 # "core" / parallel axis
    j = pl.program_id(1)                 # reduction axis (arbitrary)
    global_blk = c * steps_per_core + j  # global row-block index

    @pl.when(j == 0)
    def _init():
        part_ref[...] = jnp.zeros_like(part_ref)

    def accumulate(masked):
        # fori_loop over (chunk, 128) slices: each vreg is load->sub->mul->add,
        # accumulating into a carried (8,128) vreg -- no (TM,128) temporary.
        def body(k, acc):
            r0 = pl.multiple_of(k * chunk, chunk)
            yt = yt_ref[pl.ds(r0, chunk), :].astype(jnp.float32)
            yp = yp_ref[pl.ds(r0, chunk), :].astype(jnp.float32)
            d = yt - yp
            dsq = d * d
            if masked:
                # Mask garbage edge rows (>= m_rows) of the last (padded) block.
                # Keep the select AFTER dsq so NaN/Inf garbage is suppressed.
                row = global_blk * tm + r0 + lax.broadcasted_iota(
                    jnp.int32, (chunk, 1), 0)
                dsq = jnp.where(row < m_rows, dsq, 0.0)
            # (chunk,128) -> (chunk//8, 8, 128) splits sublanes on a vreg
            # boundary -> pure VPU vector adds.
            return acc + dsq.reshape(chunk // SUBLANE, SUBLANE, LANE).sum(axis=0)

        partial = lax.fori_loop(
            0, tm // chunk, body, jnp.zeros((SUBLANE, LANE), jnp.float32))
        part_ref[...] += partial

    def do_block():
        if need_row_mask:
            is_ragged = global_blk == num_blocks - 1

            @pl.when(is_ragged)
            def _masked():
                accumulate(True)

            @pl.when(jnp.logical_not(is_ragged))
            def _unmasked():
                accumulate(False)
        else:
            accumulate(False)

    if has_dummy:
        # Rectangular (NC, S) grid may have a few trailing dummy steps on the
        # last core; their (clamped) block is loaded but contributes nothing.
        @pl.when(global_blk < num_blocks)
        def _real():
            do_block()
    else:
        do_block()


def _combine_kernel(
    part_ref, mu_ref, lv_ref,             # inputs (full arrays in VMEM)
    total_ref, recon_ref, kld_ref,        # outputs, (1,1) f32 each
    *, n_elems, batch, recon_weight, kld_weight,
):
    ssd = jnp.sum(part_ref[...])                       # single cross-lane reduce
    recon = recon_weight * (ssd / n_elems)

    mu = mu_ref[...].astype(jnp.float32)
    lv = lv_ref[...].astype(jnp.float32)
    # mean over batch of -0.5 * sum over latent dim == -0.5/B * sum over all
    kld_sum = jnp.sum(1.0 + lv - mu * mu - jnp.exp(lv))
    kld = kld_weight * (-0.5 / batch) * kld_sum

    recon_ref[0, 0] = recon
    kld_ref[0, 0] = kld
    total_ref[0, 0] = recon + kld


def vanilla_vae_loss(y_true, y_pred, mu, log_var,
                     recon_loss_weight=10000.0, kld_loss_weight=1.0):
    """Returns (total_loss, recon_loss, kld_loss) as float32 scalars."""
    assert y_true.shape == y_pred.shape
    assert mu.shape == log_var.shape and mu.ndim == 2
    n_elems = int(np.prod(y_true.shape))
    B = mu.shape[0]

    # Flatten to a lane-dense (M, 128) view. When n_elems % 128 == 0 (typical
    # NCHW activations) this is a zero-copy row-major reinterpretation.
    flat_t = y_true.reshape(-1)
    flat_p = y_pred.reshape(-1)
    rem = n_elems % LANE
    if rem:
        # Rare fallback: pad only to the next lane multiple (<=127 zeros, which
        # contribute 0 to the SSD; n_elems keeps the true element count).
        flat_t = jnp.pad(flat_t, (0, LANE - rem))
        flat_p = jnp.pad(flat_p, (0, LANE - rem))
    yt2 = flat_t.reshape(-1, LANE)
    yp2 = flat_p.reshape(-1, LANE)
    M = yt2.shape[0]

    # Tile rows. Round TM up to the dtype's sublane tile (8 f32 / 16 bf16 /
    # 32 int8) so the BlockSpec always satisfies the packed-tiling constraint.
    itemsize = np.dtype(y_true.dtype).itemsize
    sublane_req = max(SUBLANE, 32 // max(itemsize, 1))
    TM = min(_TM_MAX, ((M + sublane_req - 1) // sublane_req) * sublane_req)
    CHUNK = 64 if TM % 64 == 0 else sublane_req        # divides TM, multiple of 8

    num_blocks = pl.cdiv(M, TM)
    NC = _NUM_CORES if num_blocks >= _NUM_CORES else 1
    S = pl.cdiv(num_blocks, NC)                        # blocks per core
    has_dummy = NC * S != num_blocks
    need_row_mask = (M % TM) != 0

    if has_dummy:
        # Clamp so dummy steps never DMA past the end of the array.
        in_idx = lambda c, j: (jnp.minimum(c * S + j, num_blocks - 1), 0)
    else:
        in_idx = lambda c, j: (c * S + j, 0)

    ssd_kernel = functools.partial(
        _ssd_partial_kernel,
        tm=TM, chunk=CHUNK, num_blocks=num_blocks, steps_per_core=S,
        m_rows=M, need_row_mask=need_row_mask, has_dummy=has_dummy)

    partials = pl.pallas_call(
        ssd_kernel,
        grid=(NC, S),
        in_specs=[
            pl.BlockSpec((TM, LANE), in_idx),          # y_true tile
            pl.BlockSpec((TM, LANE), in_idx),          # y_pred tile
        ],
        out_specs=pl.BlockSpec((SUBLANE, LANE), lambda c, j: (c, 0)),
        out_shape=jax.ShapeDtypeStruct((NC * SUBLANE, LANE), jnp.float32),
        compiler_params=pltpu.CompilerParams(
            dimension_semantics=("parallel", "arbitrary"),
            vmem_limit_bytes=48 * 1024 * 1024,
        ),
        cost_estimate=pl.CostEstimate(
            flops=3 * n_elems,
            transcendentals=0,
            bytes_accessed=2 * n_elems * itemsize + NC * SUBLANE * LANE * 4,
        ),
    )(yt2, yp2)

    combine_kernel = functools.partial(
        _combine_kernel,
        n_elems=float(n_elems), batch=float(B),
        recon_weight=float(recon_loss_weight), kld_weight=float(kld_loss_weight))

    scalar_out = jax.ShapeDtypeStruct((1, 1), jnp.float32)
    total, recon, kld = pl.pallas_call(
        combine_kernel,
        out_shape=(scalar_out, scalar_out, scalar_out),
    )(partials, mu, log_var)

    return total[0, 0], recon[0, 0], kld[0, 0]


def _reference(y_true, y_pred, mu, log_var, rw=10000.0, kw=1.0):
    recon = rw * jnp.mean((y_true - y_pred) ** 2)
    kld = kw * jnp.mean(
        -0.5 * jnp.sum(1.0 + log_var - mu**2 - jnp.exp(log_var), axis=1), axis=0)
    return recon + kld, recon, kld


if __name__ == "__main__":
    key = jax.random.PRNGKey(0)
    k1, k2, k3, k4 = jax.random.split(key, 4)

    B, C, H, W = 2, 4, 16, 16     # NCHW like the PyTorch module
    latent = 32

    y_true = jax.random.normal(k1, (B, C, H, W), jnp.float32)
    y_pred = jax.random.normal(k2, (B, C, H, W), jnp.float32)
    mu = jax.random.normal(k3, (B, latent), jnp.float32)
    log_var = 0.1 * jax.random.normal(k4, (B, latent), jnp.float32)

    total, recon, kld = jax.block_until_ready(
        vanilla_vae_loss(y_true, y_pred, mu, log_var))

    ref_total, ref_recon, ref_kld = _reference(y_true, y_pred, mu, log_var)

    assert np.allclose(np.asarray(total), np.asarray(ref_total), rtol=1e-4, atol=1e-3)
    assert np.allclose(np.asarray(recon), np.asarray(ref_recon), rtol=1e-4, atol=1e-3)
    assert np.allclose(np.asarray(kld), np.asarray(ref_kld), rtol=1e-4, atol=1e-3)

    print("KERNEL_OK")
</pallas_src>

<mosaic_0001>
module attributes {stable_mosaic.version = 11 : i64} {
  func.func @_ssd_partial_kernel(%arg0: i32, %arg1: i32, %arg2: memref<16x128xf32, #tpu.memory_space<vmem>>, %arg3: memref<16x128xf32, #tpu.memory_space<vmem>>, %arg4: memref<8x128xf32, #tpu.memory_space<vmem>>) attributes {dimension_semantics = [#tpu.dimension_semantics<parallel>, #tpu.dimension_semantics<arbitrary>], iteration_bounds = array<i64: 1, 1>, scalar_prefetch = 0 : i64, scratch_operands = 0 : i64, tpu.core_type = #tpu.core_type<tc>, window_params = [{transform_indices = @transform_0, window_bounds = array<i64: 16, 128>}, {transform_indices = @transform_1, window_bounds = array<i64: 16, 128>}, {transform_indices = @transform_2, window_bounds = array<i64: 8, 128>}]} {
    %c0_i32 = arith.constant 0 : i32
    %0 = arith.cmpi eq, %arg1, %c0_i32 : i32
    %1 = arith.extui %0 : i1 to i32
    %c0_i32_0 = arith.constant 0 : i32
    %2 = arith.cmpi ne, %1, %c0_i32_0 : i32
    scf.if %2 {
      %cst_6 = arith.constant 0.000000e+00 : f32
      %9 = vector.broadcast %cst_6 : f32 to vector<8x128xf32>
      %c0_7 = arith.constant 0 : index
      %c0_8 = arith.constant 0 : index
      %10 = vector.load %arg4[%c0_7, %c0_8] : memref<8x128xf32, #tpu.memory_space<vmem>>, vector<8x128xf32>
      tpu.vector_store %arg4[%c0_7, %c0_8], %9 {strides = array<i32>} : memref<8x128xf32, #tpu.memory_space<vmem>>, vector<8x128xf32>,
    } else {
    }
    %cst = arith.constant 0.000000e+00 : f32
    %3 = vector.broadcast %cst : f32 to vector<8x128xf32>
    %c0_i32_1 = arith.constant 0 : i32
    %c2_i32 = arith.constant 2 : i32
    %4 = arith.addi %c0_i32_1, %c2_i32 : i32
    %c1_i32 = arith.constant 1 : i32
    %5 = scf.for %arg5 = %c0_i32_1 to %4 step %c1_i32 iter_args(%arg6 = %3) -> (vector<8x128xf32>)  : i32 {
      %c8_i32 = arith.constant 8 : i32
      %9 = arith.muli %arg5, %c8_i32 : i32
      %10 = tpu.assume_multiple %9, 8 : i32
      %11 = arith.index_cast %10 : i32 to index
      %c0_6 = arith.constant 0 : index
      %12 = vector.load %arg2[%11, %c0_6] : memref<16x128xf32, #tpu.memory_space<vmem>>, vector<8x128xf32>
      %13 = arith.index_cast %10 : i32 to index
      %c0_7 = arith.constant 0 : index
      %14 = vector.load %arg3[%13, %c0_7] : memref<16x128xf32, #tpu.memory_space<vmem>>, vector<8x128xf32>
      %15 = arith.subf %12, %14 : vector<8x128xf32>
      %16 = arith.mulf %15, %15 : vector<8x128xf32>
      %17 = vector.shape_cast %16 : vector<8x128xf32> to vector<1x8x128xf32>
      %cst_8 = arith.constant dense<0.000000e+00> : vector<8x128xf32>
      %18 = vector.multi_reduction <add>, %17, %cst_8 [0] : vector<1x8x128xf32> to vector<8x128xf32>
      %19 = arith.addf %arg6, %18 : vector<8x128xf32>
      scf.yield %19 : vector<8x128xf32>
    }
    %c2_i32_2 = arith.constant 2 : i32
    %c0 = arith.constant 0 : index
    %c0_3 = arith.constant 0 : index
    %6 = vector.load %arg4[%c0, %c0_3] : memref<8x128xf32, #tpu.memory_space<vmem>>, vector<8x128xf32>
    %7 = arith.addf %6, %5 : vector<8x128xf32>
    %c0_4 = arith.constant 0 : index
    %c0_5 = arith.constant 0 : index
    %8 = vector.load %arg4[%c0_4, %c0_5] : memref<8x128xf32, #tpu.memory_space<vmem>>, vector<8x128xf32>
    tpu.vector_store %arg4[%c0_4, %c0_5], %7 {strides = array<i32>} : memref<8x128xf32, #tpu.memory_space<vmem>>, vector<8x128xf32>,
    return
  }
  func.func @transform_0(%arg0: i32, %arg1: i32) -> (i32, i32) {
    %c1_i32 = arith.constant 1 : i32
    %0 = arith.muli %arg0, %c1_i32 : i32
    %1 = arith.addi %0, %arg1 : i32
    %c0_i32 = arith.constant 0 : i32
    %c0_i32_0 = arith.constant 0 : i32
    return %1, %c0_i32 : i32, i32
  }
  func.func @transform_1(%arg0: i32, %arg1: i32) -> (i32, i32) {
    %c1_i32 = arith.constant 1 : i32
    %0 = arith.muli %arg0, %c1_i32 : i32
    %1 = arith.addi %0, %arg1 : i32
    %c0_i32 = arith.constant 0 : i32
    %c0_i32_0 = arith.constant 0 : i32
    return %1, %c0_i32 : i32, i32
  }
  func.func @transform_2(%arg0: i32, %arg1: i32) -> (i32, i32) {
    %c0_i32 = arith.constant 0 : i32
    %c0_i32_0 = arith.constant 0 : i32
    return %arg0, %c0_i32 : i32, i32
  }
}

</mosaic_0001>

<llo_original>
// kernel: tpu_custom_call.1
$region0: #{tpu_custom_call.1}
  #allocation0 [shape = 'u32[]', space=smem, size = 0x4, offset = 0x4, fixed_abs, tag = 'smem constant byte address 0x4 - core index']
  #allocation1 [shape = 'u32[72,128]{1,0:T(1,128)}', space=vmem, size = 0x9000, scoped, tag = 'internal scratch']
  %s0 = inlined_call_operand.hbm [shape: f32[16,128], index: 0, kind: input, shape index: {}]
  %s1 = inlined_call_operand.hbm [shape: f32[16,128], index: 1, kind: input, shape index: {}]
  %s2 = inlined_call_operand.hbm [shape: f32[8,128], index: 2, kind: output, shape index: {}]
  %s3 = sld [smem:[#allocation0]]
  $region37: #{tpu_custom_call.1} parent=0
    _
  %s5 = ssub.s32 1, %s3
  %s6 = scalar_select 0, %s5, %s3
  $region1: #{tpu_custom_call.1} parent=0
    #allocation2 [shape = 'u8[8192]{0}', space=vmem, size = 0x2000, scoped, tag = 'input window, operand 0, single buffered']
    #allocation3 [shape = 's32[1]{0}', space=sflag, size = 0x4, scoped, tag = 'scoped memory for tpu_custom_call.1']
    #allocation4 [shape = 's32[1]{0}', space=sflag, size = 0x4, scoped, tag = 'scoped memory for tpu_custom_call.1']
    #allocation5 [shape = 'u8[8192]{0}', space=vmem, size = 0x2000, scoped, tag = 'input window, operand 1, single buffered']
    #allocation6 [shape = 's32[1]{0}', space=sflag, size = 0x4, scoped, tag = 'scoped memory for tpu_custom_call.1']
    #allocation7 [shape = 'u8[4096]{0}', space=vmem, size = 0x1000, scoped, tag = 'output window, operand 0, single buffered']
    %7 = vsyncpa [#allocation3], 0
    %8 = vsyncpa [#allocation6], 0
    %9 = vsyncpa [#allocation4], 0
    // Predicated region
    $region2: #{tpu_custom_call.1} parent=1 // pred_check
      _
    $region3: #{tpu_custom_call.1} parent=1 // pred_check_branch
      %11 = sbr.rel (0) target = $region5
    $region4: #{tpu_custom_call.1} parent=1 // pred_region
      %s12 = sadd.s32 0, 0
      %s13 = smul.u32 2, %s12
      %15 = vsyncadd [#allocation3], 0
      %s16 = smul.addr %s13, 8
      %s17 = scalar_lea.hbm %s0, %s16
      %s18 = sshll.u32 %s17, 4
      %s19 = int_to_ptr.hbm [resolvable:$true] %s18
      %s20 = sshll.u32 [#allocation2], 4
      %s21 = int_to_ptr.vmem [resolvable:$true] %s20
      %26 = dma.hbm_to_vmem [thread:$0]  %s19, 256, %s21, [#allocation3], 128, 128, 8
    $region5: #{tpu_custom_call.1} parent=1 // pred_fallthru
      _
    // Predicated region
    $region6: #{tpu_custom_call.1} parent=1 // pred_check
      _
    $region7: #{tpu_custom_call.1} parent=1 // pred_check_branch
      %28 = sbr.rel (0) target = $region9
    $region8: #{tpu_custom_call.1} parent=1 // pred_region
      %s29 = sadd.s32 0, 0
      %s30 = smul.u32 2, %s29
      %32 = vsyncadd [#allocation6], 0
      %s33 = smul.addr %s30, 8
      %s34 = scalar_lea.hbm %s1, %s33
      %s35 = sshll.u32 %s34, 4
      %s36 = int_to_ptr.hbm [resolvable:$true] %s35
      %s37 = sshll.u32 [#allocation5], 4
      %s38 = int_to_ptr.vmem [resolvable:$true] %s37
      %43 = dma.hbm_to_vmem [thread:$0]  %s36, 256, %s38, [#allocation6], 128, 128, 8
    $region9: #{tpu_custom_call.1} parent=1 // pred_fallthru
      _
    // Predicated region
    $region10: #{tpu_custom_call.1} parent=1 // pred_check
      _
    $region11: #{tpu_custom_call.1} parent=1 // pred_check_branch
      %45 = sbr.rel (0) target = $region13
    $region12: #{tpu_custom_call.1} parent=1 // pred_region
      %47 = dma.done [#allocation3], 256
    $region13: #{tpu_custom_call.1} parent=1 // pred_fallthru
      _
    // Predicated region
    $region14: #{tpu_custom_call.1} parent=1 // pred_check
      _
    $region15: #{tpu_custom_call.1} parent=1 // pred_check_branch
      %49 = sbr.rel (0) target = $region17
    $region16: #{tpu_custom_call.1} parent=1 // pred_region
      %51 = dma.done [#allocation6], 256
    $region17: #{tpu_custom_call.1} parent=1 // pred_fallthru
      _
    %s52 = sadd.s32 0, 0
    %s53 = smul.u32 2, %s52
    %s54 = sadd.s32 0, 0
    %s55 = smul.u32 2, %s54
    %p56 = scmp.eq.s32.totalorder 0, 0
    // Predicated region
    $region18: #{tpu_custom_call.1} parent=1 // pred_check
      %p57 = pneg %p56
    $region19: #{tpu_custom_call.1} parent=1 // pred_check_branch
      %59 = sbr.rel (%p57) target = $region21
    $region20: #{tpu_custom_call.1} parent=1 // pred_region
      %60 = vst [vmem:[#allocation7] sm:$0xff] 0.0
    $region21: #{tpu_custom_call.1} parent=1 // pred_fallthru
      _
    loop: start=0, step=1, limit=2
    $region22: #{tpu_custom_call.1} parent=1 // loop_pre_header
      _
    $region23: #{tpu_custom_call.1} parent=1 // loop_header
      %s62 = sphi 0, %s66
      %p63 = scmp.ge.s32.totalorder %s62, 2
      %v67 = vphi 0.0, %v76
    $region24: #{tpu_custom_call.1} parent=1 // loop_header_branch
      %65 = sbr.rel (%p63) target = $region28
    $region25: #{tpu_custom_call.1} parent=1 // loop_body
      %s68 = smul.u32 %s62, 8
      %s69 = scalar_lea.vmem [#allocation2], %s68
      %v70 = vld [vmem:[%s69] sm:$0xff]
      %s71 = scalar_lea.vmem [#allocation5], %s68
      %v72 = vld [vmem:[%s71] sm:$0xff]
      %v73 = vsub.f32 %v70, %v72
      %v74 = vmul.f32 %v73, %v73
      %v75 = vadd.f32 %v74, 0.0
      %v76 = vadd.f32 %v67, %v75
    $region26: #{tpu_custom_call.1} parent=1 // loop_footer
      %s66 = sadd.s32 1, %s62
    $region27: #{tpu_custom_call.1} parent=1 // loop_footer_branch
      %61 = sbr.rel target = $region23
    $region28: #{tpu_custom_call.1} parent=1 // loop_exit
      _
    %v77 = vld [vmem:[#allocation7] sm:$0xff]
    %v78 = vadd.f32 %v77, %v67
    %79 = vst [vmem:[#allocation7] sm:$0xff] %v78
    // Predicated region
    $region29: #{tpu_custom_call.1} parent=1 // pred_check
      _
    $region30: #{tpu_custom_call.1} parent=1 // pred_check_branch
      %81 = sbr.rel (0) target = $region32
    $region31: #{tpu_custom_call.1} parent=1 // pred_region
      %83 = vsyncadd [#allocation4], 0
      %s85 = sshll.u32 [#allocation7], 4
      %s86 = int_to_ptr.vmem [resolvable:$true] %s85
      %s87 = sshll.u32 %s2, 4
      %s88 = int_to_ptr.hbm [resolvable:$true] %s87
      %90 = dma.vmem_to_hbm [thread:$0]  %s86, 128, %s88, [#allocation4]
    $region32: #{tpu_custom_call.1} parent=1 // pred_fallthru
      _
    // Predicated region
    $region33: #{tpu_custom_call.1} parent=1 // pred_check
      _
    $region34: #{tpu_custom_call.1} parent=1 // pred_check_branch
      %92 = sbr.rel (0) target = $region36
    $region35: #{tpu_custom_call.1} parent=1 // pred_region
      %94 = dma.done [#allocation4], 128
    $region36: #{tpu_custom_call.1} parent=1 // pred_fallthru
      _
    %95 = vsyncpa [#allocation3], 1
    %96 = vsyncpa [#allocation6], 1
    %97 = vsyncpa [#allocation4], 1

</llo_original>
